<compile_context>
chip_gen: v7x
topology: tpu7x:2x2x1
jax: 0.10.0
libtpu: 0.0.40
codegen_flags: <defaults>
</compile_context>

<pallas_src>
import jax
import jax.numpy as jnp
import numpy as np
from jax.experimental import pallas as pl
from jax.experimental.pallas import tpu as pltpu

KH = KW = 4
STRIDE = 2
PAD = 1
NEG_SLOPE = 0.2
LANE = 128


def _conv_lrelu_kernel(a_ref, halo_ref, w_ref, o_ref):
    """a_ref:    (1, tile_ho, Ws, 4*Cin)  super-pixel band           (bf16)
       halo_ref: (1, 1,       Ws, 4*Cin)  one extra super-pixel row  (bf16)
       w_ref:    (2, 2, 4*Cin, Coutp)     reordered conv weight      (bf16)
       o_ref:    (1, tile_ho, Wo, Coutp)  output tile                (f32)
    """
    th = a_ref.shape[1]
    ws = a_ref.shape[2]
    wo = ws - 1
    cp = o_ref.shape[3]

    # Band of tile_ho + 1 super-pixel rows (halo row appended).
    band = jnp.concatenate([a_ref[0], halo_ref[0]], axis=0)   # (th+1, Ws, 4*Cin)

    # 2x2 / stride-1 conv over super-pixels == original 4x4 / stride-2 conv.
    acc = jnp.zeros((th * wo, cp), dtype=jnp.float32)
    for dh in range(2):
        for dw in range(2):
            patch = band[dh:dh + th, dw:dw + wo, :].reshape(th * wo, -1)
            acc = acc + jnp.dot(patch, w_ref[dh, dw],
                                preferred_element_type=jnp.float32)

    # LeakyReLU(0.2) on the f32 accumulator (v5e-safe: no bf16 VPU math).
    y = jnp.where(acc >= 0.0, acc, NEG_SLOPE * acc)
    o_ref[0] = y.reshape(th, wo, cp).astype(o_ref.dtype)


def _pick_tile_ho(n, ho, wo, c4, coutp, in_bytes, budget_bytes=20 * 1024 * 1024):
    """Largest divisor of Ho whose double-buffered blocks fit the VMEM budget."""
    ws = wo + 1
    feasible = []
    for t in range(1, ho + 1):
        if ho % t:
            continue
        band_a = t * ws * c4 * in_bytes
        band_b = ws * c4 * in_bytes
        out_b = t * wo * coutp * 4
        w_b = 4 * c4 * coutp * in_bytes
        if 2 * (band_a + band_b + out_b + w_b) <= budget_bytes:
            feasible.append(t)
    t = feasible[-1] if feasible else 1
    # Keep >= 2 grid steps so v7x can shard across its 2 TensorCores.
    if n * (ho // t) < 2:
        for cand in reversed(feasible[:-1]):
            if ho // cand >= 2:
                t = cand
                break
    return t


def downsample(x, weight, *, compute_dtype=jnp.bfloat16):
    """x: (N, Cin, H, W) f32, weight: (Cout, Cin, 4, 4) f32 -> (N, Cout, Ho, Wo) f32."""
    N, C, H, W = x.shape
    Cout = weight.shape[0]

    Ho = (H + 2 * PAD - KH) // STRIDE + 1
    Wo = (W + 2 * PAD - KW) // STRIDE + 1
    Hs, Ws = Ho + 1, Wo + 1            # super-pixel grid (conv padding included)
    C4 = 4 * C
    Coutp = ((Cout + LANE - 1) // LANE) * LANE   # lane-dense output channels

    # ---- layout prep: one pad + transpose, NO im2col materialization ----
    pad_b = 2 * Hs - H - PAD
    pad_r = 2 * Ws - W - PAD
    xp = jnp.pad(x, ((0, 0), (0, 0), (PAD, pad_b), (PAD, pad_r)))
    # NCHW -> space-to-depth(2): (N, Hs, Ws, 4*C), last dim ordered (ph, pw, c)
    # with padded h = 2*hs + ph, padded w = 2*ws + pw.
    xs = (xp.reshape(N, C, Hs, 2, Ws, 2)
            .transpose(0, 2, 4, 3, 5, 1)
            .reshape(N, Hs, Ws, C4)
            .astype(compute_dtype))

    # weight (Cout, Cin, 4, 4) -> (dh, dw, (ph, pw, c), cout), Cout padded.
    wr = (weight.reshape(Cout, C, 2, 2, 2, 2)    # [cout, c, dh, ph, dw, pw]
                .transpose(2, 4, 3, 5, 1, 0)     # [dh, dw, ph, pw, c, cout]
                .reshape(2, 2, C4, Cout))
    wr = jnp.pad(wr, ((0, 0), (0, 0), (0, 0), (0, Coutp - Cout))).astype(compute_dtype)

    in_bytes = jnp.dtype(compute_dtype).itemsize
    tile_ho = _pick_tile_ho(N, Ho, Wo, C4, Coutp, in_bytes)
    grid = (N, Ho // tile_ho)

    out = pl.pallas_call(
        _conv_lrelu_kernel,
        out_shape=jax.ShapeDtypeStruct((N, Ho, Wo, Coutp), jnp.float32),
        grid_spec=pltpu.PrefetchScalarGridSpec(
            num_scalar_prefetch=0,
            grid=grid,
            in_specs=[
                # main band of tile_ho super-pixel rows
                pl.BlockSpec((1, tile_ho, Ws, C4), lambda n, i: (n, i, 0, 0)),
                # 1-row halo (second view of the same array)
                pl.BlockSpec((1, 1, Ws, C4),
                             lambda n, i: (n, (i + 1) * tile_ho, 0, 0)),
                # full reordered weight, resident across the grid
                pl.BlockSpec((2, 2, C4, Coutp), lambda n, i: (0, 0, 0, 0)),
            ],
            out_specs=pl.BlockSpec((1, tile_ho, Wo, Coutp),
                                   lambda n, i: (n, i, 0, 0)),
        ),
        compiler_params=pltpu.CompilerParams(
            dimension_semantics=("parallel", "parallel"),
            vmem_limit_bytes=32 * 1024 * 1024,
        ),
    )(xs, xs, wr)

    # TODO(synk): return NHWC directly when the consumer accepts it; this final
    # transpose back to NCHW is kept only to match the PyTorch layout contract.
    return out[..., :Cout].transpose(0, 3, 1, 2)


def _reference(x, weight):
    y = jax.lax.conv_general_dilated(
        x, weight,
        window_strides=(STRIDE, STRIDE),
        padding=((PAD, PAD), (PAD, PAD)),
        dimension_numbers=("NCHW", "OIHW", "NCHW"),
    )
    return jnp.where(y >= 0.0, y, NEG_SLOPE * y)


if __name__ == "__main__":
    N, Cin, H, W = 2, 4, 16, 16
    Cout = 8

    key = jax.random.PRNGKey(0)
    kx, kw = jax.random.split(key)
    x = jax.random.normal(kx, (N, Cin, H, W), dtype=jnp.float32)
    fan_in = Cin * KH * KW
    weight = jax.random.normal(kw, (Cout, Cin, KH, KW), dtype=jnp.float32) / np.sqrt(fan_in)

    y = jax.block_until_ready(downsample(x, weight))
    y_ref = jax.block_until_ready(_reference(x, weight))

    assert y.shape == (N, Cout, H // 2, W // 2), y.shape
    # bf16 MXU inputs with f32 accumulation -> tolerance loosened vs f32 reference.
    np.testing.assert_allclose(np.asarray(y), np.asarray(y_ref), rtol=5e-2, atol=5e-2)

    print("KERNEL_OK")
</pallas_src>

<mosaic_0001>
module attributes {stable_mosaic.version = 11 : i64} {
  func.func @_conv_lrelu_kernel(%arg0: i32, %arg1: i32, %arg2: memref<1x8x9x16xbf16, #tpu.memory_space<vmem>>, %arg3: memref<1x1x9x16xbf16, #tpu.memory_space<vmem>>, %arg4: memref<2x2x16x128xbf16, #tpu.memory_space<vmem>>, %arg5: memref<1x8x8x128xf32, #tpu.memory_space<vmem>>) attributes {dimension_semantics = [#tpu.dimension_semantics<parallel>, #tpu.dimension_semantics<parallel>], iteration_bounds = array<i64: 2, 1>, scalar_prefetch = 0 : i64, scratch_operands = 0 : i64, tpu.core_type = #tpu.core_type<tc>, window_params = [{transform_indices = @transform_0, window_bounds = array<i64: 1, 8, 9, 16>}, {transform_indices = @transform_1, window_bounds = array<i64: 1, 1, 9, 16>}, {pipeline_mode = #tpu.pipeline_mode<synchronous>, transform_indices = @transform_2, window_bounds = array<i64: 2, 2, 16, 128>}, {transform_indices = @transform_3, window_bounds = array<i64: 1, 8, 8, 128>}]} {
    %c0 = arith.constant 0 : index
    %c0_0 = arith.constant 0 : index
    %c0_1 = arith.constant 0 : index
    %c0_2 = arith.constant 0 : index
    %0 = vector.load %arg2[%c0, %c0_0, %c0_1, %c0_2] : memref<1x8x9x16xbf16, #tpu.memory_space<vmem>>, vector<1x8x9x16xbf16>
    %1 = vector.shape_cast %0 : vector<1x8x9x16xbf16> to vector<8x9x16xbf16>
    %c0_3 = arith.constant 0 : index
    %c0_4 = arith.constant 0 : index
    %c0_5 = arith.constant 0 : index
    %c0_6 = arith.constant 0 : index
    %2 = vector.load %arg3[%c0_3, %c0_4, %c0_5, %c0_6] : memref<1x1x9x16xbf16, #tpu.memory_space<vmem>>, vector<1x1x9x16xbf16>
    %3 = vector.shape_cast %2 : vector<1x1x9x16xbf16> to vector<1x9x16xbf16>
    %4 = tpu.concatenate %1, %3 in 0 : vector<8x9x16xbf16>, vector<1x9x16xbf16> -> vector<9x9x16xbf16>
    %cst = arith.constant 0.000000e+00 : f32
    %5 = vector.broadcast %cst : f32 to vector<64x128xf32>
    %6 = vector.extract_strided_slice %4 {offsets = [0, 0, 0], sizes = [8, 8, 16], strides = [1, 1, 1]} : vector<9x9x16xbf16> to vector<8x8x16xbf16>
    %7 = vector.shape_cast %6 : vector<8x8x16xbf16> to vector<64x16xbf16>
    %c0_7 = arith.constant 0 : index
    %c0_8 = arith.constant 0 : index
    %c0_9 = arith.constant 0 : index
    %c0_10 = arith.constant 0 : index
    %8 = vector.load %arg4[%c0_7, %c0_8, %c0_9, %c0_10] : memref<2x2x16x128xbf16, #tpu.memory_space<vmem>>, vector<1x1x16x128xbf16>
    %9 = vector.shape_cast %8 : vector<1x1x16x128xbf16> to vector<16x128xbf16>
    %cst_11 = arith.constant dense<0.000000e+00> : vector<64x128xf32>
    %10 = tpu.matmul %7, %9, %cst_11 {dimension_numbers = #tpu.dot_dimension_numbers<[1], [0], [0], [1], [0, 0, 1, 1], [], []>} : vector<64x16xbf16>, vector<16x128xbf16>, vector<64x128xf32> -> vector<64x128xf32>
    %11 = arith.addf %5, %10 : vector<64x128xf32>
    %12 = vector.extract_strided_slice %4 {offsets = [0, 1, 0], sizes = [8, 8, 16], strides = [1, 1, 1]} : vector<9x9x16xbf16> to vector<8x8x16xbf16>
    %13 = vector.shape_cast %12 : vector<8x8x16xbf16> to vector<64x16xbf16>
    %c0_12 = arith.constant 0 : index
    %c1 = arith.constant 1 : index
    %c0_13 = arith.constant 0 : index
    %c0_14 = arith.constant 0 : index
    %14 = vector.load %arg4[%c0_12, %c1, %c0_13, %c0_14] : memref<2x2x16x128xbf16, #tpu.memory_space<vmem>>, vector<1x1x16x128xbf16>
    %15 = vector.shape_cast %14 : vector<1x1x16x128xbf16> to vector<16x128xbf16>
    %cst_15 = arith.constant dense<0.000000e+00> : vector<64x128xf32>
    %16 = tpu.matmul %13, %15, %cst_15 {dimension_numbers = #tpu.dot_dimension_numbers<[1], [0], [0], [1], [0, 0, 1, 1], [], []>} : vector<64x16xbf16>, vector<16x128xbf16>, vector<64x128xf32> -> vector<64x128xf32>
    %17 = arith.addf %11, %16 : vector<64x128xf32>
    %18 = vector.extract_strided_slice %4 {offsets = [1, 0, 0], sizes = [8, 8, 16], strides = [1, 1, 1]} : vector<9x9x16xbf16> to vector<8x8x16xbf16>
    %19 = vector.shape_cast %18 : vector<8x8x16xbf16> to vector<64x16xbf16>
    %c1_16 = arith.constant 1 : index
    %c0_17 = arith.constant 0 : index
    %c0_18 = arith.constant 0 : index
    %c0_19 = arith.constant 0 : index
    %20 = vector.load %arg4[%c1_16, %c0_17, %c0_18, %c0_19] : memref<2x2x16x128xbf16, #tpu.memory_space<vmem>>, vector<1x1x16x128xbf16>
    %21 = vector.shape_cast %20 : vector<1x1x16x128xbf16> to vector<16x128xbf16>
    %cst_20 = arith.constant dense<0.000000e+00> : vector<64x128xf32>
    %22 = tpu.matmul %19, %21, %cst_20 {dimension_numbers = #tpu.dot_dimension_numbers<[1], [0], [0], [1], [0, 0, 1, 1], [], []>} : vector<64x16xbf16>, vector<16x128xbf16>, vector<64x128xf32> -> vector<64x128xf32>
    %23 = arith.addf %17, %22 : vector<64x128xf32>
    %24 = vector.extract_strided_slice %4 {offsets = [1, 1, 0], sizes = [8, 8, 16], strides = [1, 1, 1]} : vector<9x9x16xbf16> to vector<8x8x16xbf16>
    %25 = vector.shape_cast %24 : vector<8x8x16xbf16> to vector<64x16xbf16>
    %c1_21 = arith.constant 1 : index
    %c1_22 = arith.constant 1 : index
    %c0_23 = arith.constant 0 : index
    %c0_24 = arith.constant 0 : index
    %26 = vector.load %arg4[%c1_21, %c1_22, %c0_23, %c0_24] : memref<2x2x16x128xbf16, #tpu.memory_space<vmem>>, vector<1x1x16x128xbf16>
    %27 = vector.shape_cast %26 : vector<1x1x16x128xbf16> to vector<16x128xbf16>
    %cst_25 = arith.constant dense<0.000000e+00> : vector<64x128xf32>
    %28 = tpu.matmul %25, %27, %cst_25 {dimension_numbers = #tpu.dot_dimension_numbers<[1], [0], [0], [1], [0, 0, 1, 1], [], []>} : vector<64x16xbf16>, vector<16x128xbf16>, vector<64x128xf32> -> vector<64x128xf32>
    %29 = arith.addf %23, %28 : vector<64x128xf32>
    %cst_26 = arith.constant 0.000000e+00 : f32
    %30 = vector.broadcast %cst_26 : f32 to vector<64x128xf32>
    %31 = arith.cmpf oge, %29, %30 : vector<64x128xf32>
    %cst_27 = arith.constant 2.000000e-01 : f32
    %32 = vector.broadcast %cst_27 : f32 to vector<64x128xf32>
    %33 = arith.mulf %32, %29 : vector<64x128xf32>
    %34 = arith.select %31, %29, %33 : vector<64x128xi1>, vector<64x128xf32>
    %35 = vector.shape_cast %34 : vector<64x128xf32> to vector<8x8x128xf32>
    %c0_28 = arith.constant 0 : index
    %c0_29 = arith.constant 0 : index
    %c0_30 = arith.constant 0 : index
    %c0_31 = arith.constant 0 : index
    %36 = vector.load %arg5[%c0_28, %c0_29, %c0_30, %c0_31] : memref<1x8x8x128xf32, #tpu.memory_space<vmem>>, vector<1x8x8x128xf32>
    %37 = vector.shape_cast %36 : vector<1x8x8x128xf32> to vector<8x8x128xf32>
    %38 = vector.shape_cast %35 : vector<8x8x128xf32> to vector<1x8x8x128xf32>
    tpu.vector_store %arg5[%c0_28, %c0_29, %c0_30, %c0_31], %38 {strides = array<i32>} : memref<1x8x8x128xf32, #tpu.memory_space<vmem>>, vector<1x8x8x128xf32>,
    return
  }
  func.func @transform_0(%arg0: i32, %arg1: i32) -> (i32, i32, i32, i32) {
    %c0_i32 = arith.constant 0 : i32
    %c0_i32_0 = arith.constant 0 : i32
    %c0_i32_1 = arith.constant 0 : i32
    return %arg0, %arg1, %c0_i32, %c0_i32_0 : i32, i32, i32, i32
  }
  func.func @transform_1(%arg0: i32, %arg1: i32) -> (i32, i32, i32, i32) {
    %c1_i32 = arith.constant 1 : i32
    %0 = arith.addi %arg1, %c1_i32 : i32
    %c8_i32 = arith.constant 8 : i32
    %1 = arith.muli %0, %c8_i32 : i32
    %c0_i32 = arith.constant 0 : i32
    %c0_i32_0 = arith.constant 0 : i32
    %c0_i32_1 = arith.constant 0 : i32
    return %arg0, %1, %c0_i32, %c0_i32_0 : i32, i32, i32, i32
  }
  func.func @transform_2(%arg0: i32, %arg1: i32) -> (i32, i32, i32, i32) {
    %c0_i32 = arith.constant 0 : i32
    %c0_i32_0 = arith.constant 0 : i32
    %c0_i32_1 = arith.constant 0 : i32
    %c0_i32_2 = arith.constant 0 : i32
    %c0_i32_3 = arith.constant 0 : i32
    return %c0_i32, %c0_i32_0, %c0_i32_1, %c0_i32_2 : i32, i32, i32, i32
  }
  func.func @transform_3(%arg0: i32, %arg1: i32) -> (i32, i32, i32, i32) {
    %c0_i32 = arith.constant 0 : i32
    %c0_i32_0 = arith.constant 0 : i32
    %c0_i32_1 = arith.constant 0 : i32
    return %arg0, %arg1, %c0_i32, %c0_i32_0 : i32, i32, i32, i32
  }
}

</mosaic_0001>

<llo_original>
// kernel: tpu_custom_call.1
$region0: #{tpu_custom_call.1}
  #allocation0 [shape = 'u32[]', space=smem, size = 0x4, offset = 0x4, fixed_abs, tag = 'smem constant byte address 0x4 - core index']
  #allocation1 [shape = 'u32[144,128]{1,0:T(1,128)}', space=vmem, size = 0x12000, scoped, tag = 'internal scratch']
  %s0 = inlined_call_operand.vmem [shape: bf16[2,9,9,16], index: 0, kind: input, shape index: {}]
  %s1 = inlined_call_operand.vmem [shape: bf16[2,9,9,16], index: 1, kind: input, shape index: {}]
  %s2 = inlined_call_operand.vmem [shape: bf16[2,2,16,128], index: 2, kind: input, shape index: {}]
  %s3 = inlined_call_operand.hbm [shape: f32[2,8,8,128], index: 3, kind: output, shape index: {}]
  %s4 = sld [smem:[#allocation0]]
  $region45: #{tpu_custom_call.1} parent=0
    _
  %s6 = ssub.s32 1, %s4
  %s7 = scalar_select 0, %s6, %s4
  $region1: #{tpu_custom_call.1} parent=0
    #allocation2 [shape = 'u8[65536]{0}', space=vmem, size = 0x10000, scoped, tag = 'output window, operand 0']
    #allocation3 [shape = 's32[2]{0}', space=sflag, size = 0x8, scoped, tag = 'scoped memory for tpu_custom_call.1']
    %8 = vsyncpa [#allocation3], 0
    %s9 = scalar_lea.sflag [#allocation3], 1
    %10 = vsyncpa %s9, 0
    loop: start=0, step=1, limit=4
    $region2: #{tpu_custom_call.1} parent=1 // loop_pre_header
      _
    $region3: #{tpu_custom_call.1} parent=1 // loop_header
      %s12 = sphi 0, %s16
      %p13 = scmp.ge.s32.totalorder %s12, 4
      %s19 = sphi 0, %s31
      %s20 = sphi 0, %s27
      %s21 = sphi 0, %s19
      %s22 = sphi 0, %s20
      %s23 = sphi 0, %s21
      %s24 = sphi 0, %s22
      %s36 = sphi 0, %s38
      %s39 = sphi 0, %s36
      %s40 = sphi 0, %s39
      %s56 = sphi 0, %s40
      %s68 = sphi 0, %s70
      %s71 = sphi 0, %s68
      %s72 = sphi 0, %s71
      %s88 = sphi 0, %s72
      %s92 = sphi 0, %s92
      %s94 = sphi 0, %s92
      %s95 = sphi 0, %s94
      %s109 = sphi 0, %s95
      %s117 = sphi 0, %s119
      %s120 = sphi 0, %s117
      %s121 = sphi 0, %s120
      %s137 = sphi 0, %s121
    $region4: #{tpu_custom_call.1} parent=1 // loop_header_branch
      %15 = sbr.rel (%p13) target = $region8
    $region5: #{tpu_custom_call.1} parent=1 // loop_body
      %s17 = ssub.s32 %s12, 1
      %s18 = ssub.s32 %s12, 2
      %s25 = sadd.s32 1, %s20
      %p26 = scmp.ge.s32.totalorder %s25, 1
      %s27 = scalar_select %p26, 0, %s25
      %s28 = sadd.s32 1, %s19
      %s29 = scalar_select %p26, %s28, %s19
      %p30 = scmp.ge.s32.totalorder %s29, 2
      %s31 = scalar_select %p30, 0, %s29
      %s32 = ssub.s32 %s19, %s31
      %s33 = ssub.s32 %s20, %s27
      %s34 = sor.u32 %s32, %s33
      %p35 = scmp.eq.s32.totalorder %s34, 0
      %s37 = sadd.s32 %s36, 1
      %s38 = scalar_select %p35, %s36, %s37
      %p41 = pneg %p35
      %p42 = scmp.eq.s32.totalorder %s12, 1
      %p43 = por %p41, %p42
      %p44 = scmp.ne.s32.totalorder %s36, %s39
      %p45 = scmp.eq.s32.totalorder %s12, 0
      %p46 = por %p44, %p45
      %p47 = scmp.ne.s32.totalorder %s36, %s39
      %p48 = scmp.eq.s32.totalorder %s17, 1
      %p49 = por %p47, %p48
      %p50 = scmp.ne.s32.totalorder %s39, %s40
      %p51 = scmp.eq.s32.totalorder %s17, 0
      %p52 = por %p50, %p51
      %p53 = scmp.ne.s32.totalorder %s39, %s40
      %p54 = scmp.eq.s32.totalorder %s18, 1
      %p55 = por %p53, %p54
      %p57 = scmp.ne.s32.totalorder %s40, %s56
      %p58 = scmp.eq.s32.totalorder %s18, 0
      %p59 = por %p57, %p58
      %s60 = sadd.s32 %s20, 1
      %s61 = smul.u32 %s60, 8
      %s62 = sadd.s32 %s27, 1
      %s63 = smul.u32 %s62, 8
      %s64 = ssub.s32 %s19, %s31
      %s65 = ssub.s32 %s61, %s63
      %s66 = sor.u32 %s64, %s65
      %p67 = scmp.eq.s32.totalorder %s66, 0
      %s69 = sadd.s32 %s68, 1
      %s70 = scalar_select %p67, %s68, %s69
      %p73 = pneg %p67
      %p74 = scmp.eq.s32.totalorder %s12, 1
      %p75 = por %p73, %p74
      %p76 = scmp.ne.s32.totalorder %s68, %s71
      %p77 = scmp.eq.s32.totalorder %s12, 0
      %p78 = por %p76, %p77
      %p79 = scmp.ne.s32.totalorder %s68, %s71
      %p80 = scmp.eq.s32.totalorder %s17, 1
      %p81 = por %p79, %p80
      %p82 = scmp.ne.s32.totalorder %s71, %s72
      %p83 = scmp.eq.s32.totalorder %s17, 0
      %p84 = por %p82, %p83
      %p85 = scmp.ne.s32.totalorder %s71, %s72
      %p86 = scmp.eq.s32.totalorder %s18, 1
      %p87 = por %p85, %p86
      %p89 = scmp.ne.s32.totalorder %s72, %s88
      %p90 = scmp.eq.s32.totalorder %s18, 0
      %p91 = por %p89, %p90
      %s93 = sadd.s32 %s92, 1
      %p96 = scmp.eq.s32.totalorder %s12, 1
      %p97 = scmp.ne.s32.totalorder %s92, %s94
      %p98 = scmp.eq.s32.totalorder %s12, 0
      %p99 = por %p97, %p98
      %p100 = scmp.ne.s32.totalorder %s92, %s94
      %p101 = scmp.eq.s32.totalorder %s17, 1
      %p102 = por %p100, %p101
      %p103 = scmp.ne.s32.totalorder %s94, %s95
      %p104 = scmp.eq.s32.totalorder %s17, 0
      %p105 = por %p103, %p104
      %p106 = scmp.ne.s32.totalorder %s94, %s95
      %p107 = scmp.eq.s32.totalorder %s18, 1
      %p108 = por %p106, %p107
      %p110 = scmp.ne.s32.totalorder %s95, %s109
      %p111 = scmp.eq.s32.totalorder %s18, 0
      %p112 = por %p110, %p111
      %s113 = ssub.s32 %s19, %s31
      %s114 = ssub.s32 %s20, %s27
      %s115 = sor.u32 %s113, %s114
      %p116 = scmp.eq.s32.totalorder %s115, 0
      %s118 = sadd.s32 %s117, 1
      %s119 = scalar_select %p116, %s117, %s118
      %p122 = pneg %p116
      %p123 = scmp.eq.s32.totalorder %s12, 1
      %p124 = por %p122, %p123
      %p125 = scmp.ne.s32.totalorder %s117, %s120
      %p126 = scmp.eq.s32.totalorder %s12, 0
      %p127 = por %p125, %p126
      %p128 = scmp.ne.s32.totalorder %s117, %s120
      %p129 = scmp.eq.s32.totalorder %s17, 1
      %p130 = por %p128, %p129
      %p131 = scmp.ne.s32.totalorder %s120, %s121
      %p132 = scmp.eq.s32.totalorder %s17, 0
      %p133 = por %p131, %p132
      %p134 = scmp.ne.s32.totalorder %s120, %s121
      %p135 = scmp.eq.s32.totalorder %s18, 1
      %p136 = por %p134, %p135
      %p138 = scmp.ne.s32.totalorder %s121, %s137
      %p139 = scmp.eq.s32.totalorder %s18, 0
      %p140 = por %p138, %p139
      %p141 = scmp.le.s32.totalorder 1, %s12
      %p142 = scmp.lt.s32.totalorder %s12, 3
      %p143 = pnand %p141, %p142
      %p144 = pneg %p143
      // Predicated region
      $region9: #{tpu_custom_call.1} parent=5 // pred_check
        _
      $region10: #{tpu_custom_call.1} parent=5 // pred_check_branch
        %146 = sbr.rel (%p143) target = $region12
      $region11: #{tpu_custom_call.1} parent=5 // pred_region
        %s147 = ssub.s32 %s12, 1
        // Predicated region
        $region13: #{tpu_custom_call.1} parent=11 // pred_check
          %p148 = pneg %p105
        $region14: #{tpu_custom_call.1} parent=11 // pred_check_branch
          %150 = sbr.rel (%p148) target = $region16
        $region15: #{tpu_custom_call.1} parent=11 // pred_region
          _
        $region16: #{tpu_custom_call.1} parent=11 // pred_fallthru
          _
      $region12: #{tpu_custom_call.1} parent=5 // pred_fallthru
        _
      %p151 = scmp.lt.s32.totalorder %s12, 2
      // Predicated region
      $region17: #{tpu_custom_call.1} parent=5 // pred_check
        %p152 = pneg %p151
      $region18: #{tpu_custom_call.1} parent=5 // pred_check_branch
        %154 = sbr.rel (%p152) target = $region20
      $region19: #{tpu_custom_call.1} parent=5 // pred_region
        // Predicated region
        $region21: #{tpu_custom_call.1} parent=19 // pred_check
          %p155 = pneg %p46
        $region22: #{tpu_custom_call.1} parent=19 // pred_check_branch
          %157 = sbr.rel (%p155) target = $region24
        $region23: #{tpu_custom_call.1} parent=19 // pred_region
          %s158 = smul.u32 8, %s20
          %s159 = ssub.s32 9, %s158
          %p160 = scmp.lt.s32.totalorder %s159, 8
          %s161 = scalar_select %p160, %s159, 8
          %s162 = smul.u32 64, %s161
          %s163 = smul.u32 %s162, 2
          %p164 = scmp.lt.s32.totalorder %s19, 1
          %s165 = scalar_select %p164, %s19, 1
          %p166 = scmp.lt.s32.totalorder %s158, 8
          %s167 = scalar_select %p166, %s158, 8
          %s168 = smul.addr %s167, 2
          %s169 = smul.addr %s165, 18
          %s170 = sadd.s32 %s168, %s169
          %s171 = smul.addr %s170, 4
          %s172 = scalar_lea.vmem %s0, %s171
          %s173 = smul.u32 8, %s20
          %s174 = ssub.s32 9, %s173
          %p175 = scmp.lt.s32.totalorder %s174, 8
          %s176 = scalar_select %p175, %s174, 8
          %s177 = smul.u32 64, %s176
          %s178 = smul.u32 %s177, 2
        $region24: #{tpu_custom_call.1} parent=19 // pred_fallthru
          _
        // Predicated region
        $region25: #{tpu_custom_call.1} parent=19 // pred_check
          %p179 = pneg %p78
        $region26: #{tpu_custom_call.1} parent=19 // pred_check_branch
          %181 = sbr.rel (%p179) target = $region28
        $region27: #{tpu_custom_call.1} parent=19 // pred_region
          %s182 = sadd.s32 %s20, 1
          %s183 = smul.u32 %s182, 8
          %p184 = scmp.lt.s32.totalorder %s19, 1
          %s185 = scalar_select %p184, %s19, 1
          %p186 = scmp.lt.s32.totalorder %s183, 8
          %s187 = scalar_select %p186, %s183, 8
          %s188 = smul.addr %s187, 2
          %s189 = smul.addr %s185, 18
          %s190 = sadd.s32 %s188, %s189
          %s191 = smul.addr %s190, 4
          %s192 = scalar_lea.vmem %s1, %s191
          %s193 = sadd.s32 %s20, 1
          %s194 = smul.u32 %s193, 8
        $region28: #{tpu_custom_call.1} parent=19 // pred_fallthru
          _
      $region20: #{tpu_custom_call.1} parent=5 // pred_fallthru
        _
      %p195 = scmp.le.s32.totalorder 1, %s12
      %p196 = scmp.lt.s32.totalorder %s12, 3
      %p197 = pnand %p195, %p196
      %p198 = pneg %p197
      // Predicated region
      $region29: #{tpu_custom_call.1} parent=5 // pred_check
        _
      $region30: #{tpu_custom_call.1} parent=5 // pred_check_branch
        %200 = sbr.rel (%p197) target = $region32
      $region31: #{tpu_custom_call.1} parent=5 // pred_region
        %s201 = ssub.s32 %s12, 1
        %s202 = smul.u32 8, %s22
        %s203 = ssub.s32 9, %s202
        %p204 = scmp.lt.s32.totalorder %s203, 8
        %s205 = scalar_select %p204, %s203, 8
        %s206 = smul.u32 64, %s205
        %s207 = smul.u32 %s206, 2
        %p208 = scmp.lt.s32.totalorder %s21, 1
        %s209 = scalar_select %p208, %s21, 1
        %p210 = scmp.lt.s32.totalorder %s202, 8
        %s211 = scalar_select %p210, %s202, 8
        %s212 = smul.addr %s211, 2
        %s213 = smul.addr %s209, 18
        %s214 = sadd.s32 %s212, %s213
        %s215 = smul.addr %s214, 4
        %s216 = scalar_lea.vmem %s0, %s215
        %p217 = pneg %p52
        %p218 = pneg %p49
        %s219 = sadd.s32 %s22, 1
        %s220 = smul.u32 %s219, 8
        %p221 = scmp.lt.s32.totalorder %s21, 1
        %s222 = scalar_select %p221, %s21, 1
        %p223 = scmp.lt.s32.totalorder %s220, 8
        %s224 = scalar_select %p223, %s220, 8
        %s225 = smul.addr %s224, 2
        %s226 = smul.addr %s222, 18
        %s227 = sadd.s32 %s225, %s226
        %s228 = smul.addr %s227, 4
        %s229 = scalar_lea.vmem %s1, %s228
        %p230 = pneg %p84
        %p231 = pneg %p81
        %p232 = pneg %p105
        %p233 = pneg %p102
        %p234 = pneg %p133
        %p235 = pneg %p130
        %s236 = sand.u32 %s120, 1
        %s237 = scalar_lea.sflag [#allocation3], %s236
        %s238 = sand.u32 %s120, 1
        %s239 = smul.addr %s238, 64
        %s240 = scalar_lea.vmem [#allocation2], %s239
        %s241 = smul.u32 8, %s22
        %s242 = ssub.s32 9, %s241
        %p243 = scmp.lt.s32.totalorder %s242, 8
        %s244 = scalar_select %p243, %s242, 8
        %s245 = smul.u32 64, %s244
        %s246 = smul.u32 %s245, 2
        %p247 = scmp.lt.s32.totalorder %s21, 1
        %s248 = scalar_select %p247, %s21, 1
        %p249 = scmp.lt.s32.totalorder %s241, 8
        %s250 = scalar_select %p249, %s241, 8
        %s251 = smul.addr %s250, 2
        %s252 = smul.addr %s248, 18
        %s253 = sadd.s32 %s251, %s252
        %s254 = smul.addr %s253, 4
        %s255 = scalar_lea.vmem %s0, %s254
        %s256 = smul.u32 8, %s22
        %s257 = ssub.s32 9, %s256
        %p258 = scmp.lt.s32.totalorder %s257, 8
        %s259 = scalar_select %p258, %s257, 8
        %s260 = smul.u32 64, %s259
        %s261 = smul.u32 %s260, 2
        %s262 = sadd.s32 %s22, 1
        %s263 = smul.u32 %s262, 8
        %p264 = scmp.lt.s32.totalorder %s21, 1
        %s265 = scalar_select %p264, %s21, 1
        %p266 = scmp.lt.s32.totalorder %s263, 8
        %s267 = scalar_select %p266, %s263, 8
        %s268 = smul.addr %s267, 2
        %s269 = smul.addr %s265, 18
        %s270 = sadd.s32 %s268, %s269
        %s271 = smul.addr %s270, 4
        %s272 = scalar_lea.vmem %s1, %s271
        %s273 = sadd.s32 %s22, 1
        %s274 = smul.u32 %s273, 8
        %s275 = smul.u32 8, %s22
        %v277 = vld [vmem:[%s255] sm:$0xf]
        %v278 = vld [vmem:[%s255 + $0x4] sm:$0x1]
        %v279 = vld [vmem:[%s255 + $0x8] sm:$0xf]
        %v280 = vld [vmem:[%s255 + $0xc] sm:$0x1]
        %v281 = vld [vmem:[%s255 + $0x10] sm:$0xf]
        %v282 = vld [vmem:[%s255 + $0x14] sm:$0x1]
        %v283 = vld [vmem:[%s255 + $0x18] sm:$0xf]
        %v284 = vld [vmem:[%s255 + $0x1c] sm:$0x1]
        %v285 = vld [vmem:[%s255 + $0x20] sm:$0xf]
        %v286 = vld [vmem:[%s255 + $0x24] sm:$0x1]
        %v287 = vld [vmem:[%s255 + $0x28] sm:$0xf]
        %v288 = vld [vmem:[%s255 + $0x2c] sm:$0x1]
        %v289 = vld [vmem:[%s255 + $0x30] sm:$0xf]
        %v290 = vld [vmem:[%s255 + $0x34] sm:$0x1]
        %v291 = vld [vmem:[%s255 + $0x38] sm:$0xf]
        %v292 = vld [vmem:[%s255 + $0x3c] sm:$0x1]
        %v293 = vld [vmem:[%s272] sm:$0xf]
        %v294 = vld [vmem:[%s272 + $0x4] sm:$0x1]
        %v295 = vld [vmem:[%s2] sm:$0xf]
        %v296 = vld [vmem:[%s2 + $0x4] sm:$0xf]
        %vm297 = vsmask.f32 3328
        %vm298 = vsmask.f32 7440
        %vm299 = vmor %vm297, %vm298
        %v301 = vshrl.u32 %v277, 16
        %v303 = vrot.slane %v301, 4
        %v304 = vshll.u32 %v277, 16
        %v306 = vrot.slane %v304, 5
        %v307 = vor.u32 %v303, %v306
        %v308 = vrot.slane %v307, 4
        %v310 = vshll.u32 %v278, 16
        %v312 = vrot.slane %v310, 5
        %v313 = vsel %vm299, %v308, %v312
        %v315 = vshrl.u32 %v279, 16
        %v317 = vrot.slane %v315, 4
        %v318 = vshll.u32 %v279, 16
        %v320 = vrot.slane %v318, 5
        %v321 = vor.u32 %v317, %v320
        %v322 = vrot.slane %v321, 4
        %v324 = vshll.u32 %v280, 16
        %v326 = vrot.slane %v324, 5
        %v327 = vsel %vm299, %v322, %v326
        %v329 = vshrl.u32 %v281, 16
        %v331 = vrot.slane %v329, 4
        %v332 = vshll.u32 %v281, 16
        %v334 = vrot.slane %v332, 5
        %v335 = vor.u32 %v331, %v334
        %v336 = vrot.slane %v335, 4
        %v338 = vshll.u32 %v282, 16
        %v340 = vrot.slane %v338, 5
        %v341 = vsel %vm299, %v336, %v340
        %v343 = vshrl.u32 %v283, 16
        %v345 = vrot.slane %v343, 4
        %v346 = vshll.u32 %v283, 16
        %v348 = vrot.slane %v346, 5
        %v349 = vor.u32 %v345, %v348
        %v350 = vrot.slane %v349, 4
        %v352 = vshll.u32 %v284, 16
        %v354 = vrot.slane %v352, 5
        %v355 = vsel %vm299, %v350, %v354
        %v357 = vshrl.u32 %v285, 16
        %v359 = vrot.slane %v357, 4
        %v360 = vshll.u32 %v285, 16
        %v362 = vrot.slane %v360, 5
        %v363 = vor.u32 %v359, %v362
        %v364 = vrot.slane %v363, 4
        %v366 = vshll.u32 %v286, 16
        %v368 = vrot.slane %v366, 5
        %v369 = vsel %vm299, %v364, %v368
        %v371 = vshrl.u32 %v287, 16
        %v373 = vrot.slane %v371, 4
        %v374 = vshll.u32 %v287, 16
        %v376 = vrot.slane %v374, 5
        %v377 = vor.u32 %v373, %v376
        %v378 = vrot.slane %v377, 4
        %v380 = vshll.u32 %v288, 16
        %v382 = vrot.slane %v380, 5
        %v383 = vsel %vm299, %v378, %v382
        %v385 = vshrl.u32 %v289, 16
        %v387 = vrot.slane %v385, 4
        %v388 = vshll.u32 %v289, 16
        %v390 = vrot.slane %v388, 5
        %v391 = vor.u32 %v387, %v390
        %v392 = vrot.slane %v391, 4
        %v394 = vshll.u32 %v290, 16
        %v396 = vrot.slane %v394, 5
        %v397 = vsel %vm299, %v392, %v396
        %v399 = vshrl.u32 %v291, 16
        %v401 = vrot.slane %v399, 4
        %v402 = vshll.u32 %v291, 16
        %v404 = vrot.slane %v402, 5
        %v405 = vor.u32 %v401, %v404
        %v406 = vrot.slane %v405, 4
        %v408 = vshll.u32 %v292, 16
        %v410 = vrot.slane %v408, 5
        %v411 = vsel %vm299, %v406, %v410
        %s412 = scalar_lea.vmem %s2, 8
        %v413 = vld [vmem:[%s412] sm:$0xf]
        %v414 = vld [vmem:[%s412 + $0x4] sm:$0xf]
        %v415 = vunpack.c.l.b16 %v313
        %v416 = vunpack.c.l.b16 %v327
        %v417 = vunpack.c.l.b16 %v341
        %v418 = vunpack.c.l.b16 %v355
        %v419 = vunpack.c.l.b16 %v369
        %v420 = vunpack.c.l.b16 %v383
        %v421 = vunpack.c.l.b16 %v397
        %v422 = vunpack.c.l.b16 %v411
        %v423 = vpack.c.b16 %v416, %v415
        %v424 = vpack.c.b16 %v418, %v417
        %v425 = vpack.c.b16 %v420, %v419
        %v426 = vpack.c.b16 %v422, %v421
        %v429 = vunpack.c.l.b16 %v413
        %v430 = vunpack.c.l.b16 %v414
        %v431 = vpack.c.b16 %v430, %v429
        %vm433 = vcmask 130048
        %v435 = vsel %vm433, %v423, 0
        %v438 = vsel %vm433, %v424, 0
        %v441 = vsel %vm433, %v425, 0
        %v444 = vsel %vm433, %v426, 0
        %446 = vmatprep.subr.bf16.mxu0 0
        %447 = vmatpush1.bf16.msra.mxu0 %v431
        %448 = vmatprep.subr.bf16.mxu0 0
        %449 = vmatpush1.bf16.msra.mxu0 0
        %450 = vmatprep.subr.bf16.mxu0 0
        %451 = vmatpush1.bf16.msra.mxu0 0
        %452 = vmatprep.subr.bf16.mxu0 0
        %453 = vmatpush1.bf16.msra.mxu0 0
        %454 = vmatprep.subr.bf16.mxu0 0
        %455 = vmatpush1.bf16.msra.mxu0 0
        %456 = vmatprep.subr.bf16.mxu0 0
        %457 = vmatpush1.bf16.msra.mxu0 0
        %458 = vmatprep.subr.bf16.mxu0 0
        %459 = vmatpush1.bf16.msra.mxu0 0
        %460 = vmatprep.subr.bf16.mxu0 0
        %461 = vmatpush1.bf16.msra.mxu0 0
        %462 = vmatprep.subr.bf16.mxu0 0
        %463 = vmatpush1.bf16.msra.mxu0 0
        %464 = vmatprep.subr.bf16.mxu0 0
        %465 = vmatpush1.bf16.msra.mxu0 0
        %466 = vmatprep.subr.bf16.mxu0 0
        %467 = vmatpush1.bf16.msra.mxu0 0
        %468 = vmatprep.subr.bf16.mxu0 0
        %469 = vmatpush1.bf16.msra.mxu0 0
        %470 = vmatprep.subr.bf16.mxu0 0
        %471 = vmatpush1.bf16.msra.mxu0 0
        %472 = vmatprep.subr.bf16.mxu0 0
        %473 = vmatpush1.bf16.msra.mxu0 0
        %474 = vmatprep.subr.bf16.mxu0 0
        %475 = vmatpush1.bf16.msra.mxu0 0
        %476 = vmatprep.subr.bf16.mxu0 0
        %477 = vmatpush1.bf16.msra.mxu0 0
        %478 = vmatprep.mubr.bf16.mxu0 0
        %479 = vmatmul.mubr.bf16.gmra.mrb[0].mxu0 %v435
        %v480 = vpop.f32.mrb[0].mxu0
        %v481 = vadd.f32 0.0, %v480
        %v482 = vpop.f32.mrb[0].mxu0
        %v483 = vpop.f32.mrb[0].mxu0
        %v484 = vadd.f32 0.0, %v483
        %v485 = vpop.f32.mrb[0].mxu0
        %486 = vmatprep.mubr.bf16.mxu0 0
        %487 = vmatmul.mubr.bf16.gmra.mrb[0].mxu0 %v438
        %v488 = vpop.f32.mrb[0].mxu0
        %v489 = vadd.f32 0.0, %v488
        %v490 = vpop.f32.mrb[0].mxu0
        %v491 = vpop.f32.mrb[0].mxu0
        %v492 = vadd.f32 0.0, %v491
        %v493 = vpop.f32.mrb[0].mxu0
        %494 = vmatprep.mubr.bf16.mxu0 0
        %495 = vmatmul.mubr.bf16.gmra.mrb[0].mxu0 %v441
        %v496 = vpop.f32.mrb[0].mxu0
        %v497 = vadd.f32 0.0, %v496
        %v498 = vpop.f32.mrb[0].mxu0
        %v499 = vpop.f32.mrb[0].mxu0
        %v500 = vadd.f32 0.0, %v499
        %v501 = vpop.f32.mrb[0].mxu0
        %502 = vmatprep.mubr.bf16.mxu0 0
        %503 = vmatmul.mubr.bf16.gmra.mrb[0].mxu0 %v444
        %v504 = vpop.f32.mrb[0].mxu0
        %v505 = vadd.f32 0.0, %v504
        %v506 = vpop.f32.mrb[0].mxu0
        %v507 = vpop.f32.mrb[0].mxu0
        %v508 = vadd.f32 0.0, %v507
        %v509 = vpop.f32.mrb[0].mxu0
        %510 = vdwg.mxu0
        %v519 = vunpack.c.l.b16 %v277
        %v520 = vunpack.c.l.b16 %v279
        %v521 = vunpack.c.l.b16 %v281
        %v522 = vunpack.c.l.b16 %v283
        %v523 = vunpack.c.l.b16 %v285
        %v524 = vunpack.c.l.b16 %v287
        %v525 = vunpack.c.l.b16 %v289
        %v526 = vunpack.c.l.b16 %v291
        %v527 = vpack.c.b16 %v520, %v519
        %v528 = vpack.c.b16 %v522, %v521
        %v529 = vpack.c.b16 %v524, %v523
        %v530 = vpack.c.b16 %v526, %v525
        %v533 = vunpack.c.l.b16 %v295
        %v534 = vunpack.c.l.b16 %v296
        %v535 = vpack.c.b16 %v534, %v533
        %v538 = vsel %vm433, %v527, 0
        %v541 = vsel %vm433, %v528, 0
        %v544 = vsel %vm433, %v529, 0
        %v547 = vsel %vm433, %v530, 0
        %549 = vmatprep.subr.bf16.mxu0 0
        %550 = vmatpush1.bf16.msra.mxu0 %v535
        %551 = vmatprep.subr.bf16.mxu0 0
        %552 = vmatpush1.bf16.msra.mxu0 0
        %553 = vmatprep.subr.bf16.mxu0 0
        %554 = vmatpush1.bf16.msra.mxu0 0
        %555 = vmatprep.subr.bf16.mxu0 0
        %556 = vmatpush1.bf16.msra.mxu0 0
        %557 = vmatprep.subr.bf16.mxu0 0
        %558 = vmatpush1.bf16.msra.mxu0 0
        %559 = vmatprep.subr.bf16.mxu0 0
        %560 = vmatpush1.bf16.msra.mxu0 0
        %561 = vmatprep.subr.bf16.mxu0 0
        %562 = vmatpush1.bf16.msra.mxu0 0
        %563 = vmatprep.subr.bf16.mxu0 0
        %564 = vmatpush1.bf16.msra.mxu0 0
        %565 = vmatprep.subr.bf16.mxu0 0
        %566 = vmatpush1.bf16.msra.mxu0 0
        %567 = vmatprep.subr.bf16.mxu0 0
        %568 = vmatpush1.bf16.msra.mxu0 0
        %569 = vmatprep.subr.bf16.mxu0 0
        %570 = vmatpush1.bf16.msra.mxu0 0
        %571 = vmatprep.subr.bf16.mxu0 0
        %572 = vmatpush1.bf16.msra.mxu0 0
        %573 = vmatprep.subr.bf16.mxu0 0
        %574 = vmatpush1.bf16.msra.mxu0 0
        %575 = vmatprep.subr.bf16.mxu0 0
        %576 = vmatpush1.bf16.msra.mxu0 0
        %577 = vmatprep.subr.bf16.mxu0 0
        %578 = vmatpush1.bf16.msra.mxu0 0
        %579 = vmatprep.subr.bf16.mxu0 0
        %580 = vmatpush1.bf16.msra.mxu0 0
        %581 = vmatprep.mubr.bf16.mxu0 0
        %582 = vmatmul.mubr.bf16.gmra.mrb[0].mxu0 %v538
        %v583 = vpop.f32.mrb[0].mxu0
        %v584 = vadd.f32 %v481, %v583
        %v585 = vpop.f32.mrb[0].mxu0
        %v586 = vpop.f32.mrb[0].mxu0
        %v587 = vadd.f32 %v484, %v586
        %v588 = vpop.f32.mrb[0].mxu0
        %589 = vmatprep.mubr.bf16.mxu0 0
        %590 = vmatmul.mubr.bf16.gmra.mrb[0].mxu0 %v541
        %v591 = vpop.f32.mrb[0].mxu0
        %v592 = vadd.f32 %v489, %v591
        %v593 = vpop.f32.mrb[0].mxu0
        %v594 = vpop.f32.mrb[0].mxu0
        %v595 = vadd.f32 %v492, %v594
        %v596 = vpop.f32.mrb[0].mxu0
        %597 = vmatprep.mubr.bf16.mxu0 0
        %598 = vmatmul.mubr.bf16.gmra.mrb[0].mxu0 %v544
        %v599 = vpop.f32.mrb[0].mxu0
        %v600 = vadd.f32 %v497, %v599
        %v601 = vpop.f32.mrb[0].mxu0
        %v602 = vpop.f32.mrb[0].mxu0
        %v603 = vadd.f32 %v500, %v602
        %v604 = vpop.f32.mrb[0].mxu0
        %605 = vmatprep.mubr.bf16.mxu0 0
        %606 = vmatmul.mubr.bf16.gmra.mrb[0].mxu0 %v547
        %v607 = vpop.f32.mrb[0].mxu0
        %v608 = vadd.f32 %v505, %v607
        %v609 = vpop.f32.mrb[0].mxu0
        %v610 = vpop.f32.mrb[0].mxu0
        %v611 = vadd.f32 %v508, %v610
        %v612 = vpop.f32.mrb[0].mxu0
        %613 = vdwg.mxu0
        %s614 = scalar_lea.vmem %s2, 16
        %v615 = vld [vmem:[%s614] sm:$0xf]
        %v616 = vld [vmem:[%s614 + $0x4] sm:$0xf]
        %v618 = vunpack.c.l.b16 %v293
        %v619 = vpack.c.b16 %v521, %v520
        %v620 = vpack.c.b16 %v523, %v522
        %v621 = vpack.c.b16 %v525, %v524
        %v622 = vpack.c.b16 %v618, %v526
        %v625 = vunpack.c.l.b16 %v615
        %v626 = vunpack.c.l.b16 %v616
        %v627 = vpack.c.b16 %v626, %v625
        %v630 = vsel %vm433, %v619, 0
        %v633 = vsel %vm433, %v620, 0
        %v636 = vsel %vm433, %v621, 0
        %v639 = vsel %vm433, %v622, 0
        %641 = vmatprep.subr.bf16.mxu0 0
        %642 = vmatpush1.bf16.msra.mxu0 %v627
        %643 = vmatprep.subr.bf16.mxu0 0
        %644 = vmatpush1.bf16.msra.mxu0 0
        %645 = vmatprep.subr.bf16.mxu0 0
        %646 = vmatpush1.bf16.msra.mxu0 0
        %647 = vmatprep.subr.bf16.mxu0 0
        %648 = vmatpush1.bf16.msra.mxu0 0
        %649 = vmatprep.subr.bf16.mxu0 0
        %650 = vmatpush1.bf16.msra.mxu0 0
        %651 = vmatprep.subr.bf16.mxu0 0
        %652 = vmatpush1.bf16.msra.mxu0 0
        %653 = vmatprep.subr.bf16.mxu0 0
        %654 = vmatpush1.bf16.msra.mxu0 0
        %655 = vmatprep.subr.bf16.mxu0 0
        %656 = vmatpush1.bf16.msra.mxu0 0
        %657 = vmatprep.subr.bf16.mxu0 0
        %658 = vmatpush1.bf16.msra.mxu0 0
        %659 = vmatprep.subr.bf16.mxu0 0
        %660 = vmatpush1.bf16.msra.mxu0 0
        %661 = vmatprep.subr.bf16.mxu0 0
        %662 = vmatpush1.bf16.msra.mxu0 0
        %663 = vmatprep.subr.bf16.mxu0 0
        %664 = vmatpush1.bf16.msra.mxu0 0
        %665 = vmatprep.subr.bf16.mxu0 0
        %666 = vmatpush1.bf16.msra.mxu0 0
        %667 = vmatprep.subr.bf16.mxu0 0
        %668 = vmatpush1.bf16.msra.mxu0 0
        %669 = vmatprep.subr.bf16.mxu0 0
        %670 = vmatpush1.bf16.msra.mxu0 0
        %671 = vmatprep.subr.bf16.mxu0 0
        %672 = vmatpush1.bf16.msra.mxu0 0
        %673 = vmatprep.mubr.bf16.mxu0 0
        %674 = vmatmul.mubr.bf16.gmra.mrb[0].mxu0 %v630
        %v675 = vpop.f32.mrb[0].mxu0
        %v676 = vadd.f32 0.0, %v675
        %v677 = vpop.f32.mrb[0].mxu0
        %v678 = vpop.f32.mrb[0].mxu0
        %v679 = vadd.f32 0.0, %v678
        %v680 = vpop.f32.mrb[0].mxu0
        %681 = vmatprep.mubr.bf16.mxu0 0
        %682 = vmatmul.mubr.bf16.gmra.mrb[0].mxu0 %v633
        %v683 = vpop.f32.mrb[0].mxu0
        %v684 = vadd.f32 0.0, %v683
        %v685 = vpop.f32.mrb[0].mxu0
        %v686 = vpop.f32.mrb[0].mxu0
        %v687 = vadd.f32 0.0, %v686
        %v688 = vpop.f32.mrb[0].mxu0
        %689 = vmatprep.mubr.bf16.mxu0 0
        %690 = vmatmul.mubr.bf16.gmra.mrb[0].mxu0 %v636
        %v691 = vpop.f32.mrb[0].mxu0
        %v692 = vadd.f32 0.0, %v691
        %v693 = vpop.f32.mrb[0].mxu0
        %v694 = vpop.f32.mrb[0].mxu0
        %v695 = vadd.f32 0.0, %v694
        %v696 = vpop.f32.mrb[0].mxu0
        %697 = vmatprep.mubr.bf16.mxu0 0
        %698 = vmatmul.mubr.bf16.gmra.mrb[0].mxu0 %v639
        %v699 = vpop.f32.mrb[0].mxu0
        %v700 = vadd.f32 0.0, %v699
        %v701 = vpop.f32.mrb[0].mxu0
        %v702 = vpop.f32.mrb[0].mxu0
        %v703 = vadd.f32 0.0, %v702
        %v704 = vpop.f32.mrb[0].mxu0
        %705 = vdwg.mxu0
        %v706 = vadd.f32 %v584, %v676
        %v707 = vadd.f32 %v587, %v679
        %v708 = vadd.f32 %v592, %v684
        %v709 = vadd.f32 %v595, %v687
        %v710 = vadd.f32 %v600, %v692
        %v711 = vadd.f32 %v603, %v695
        %v712 = vadd.f32 %v608, %v700
        %v713 = vadd.f32 %v611, %v703
        %v715 = vshrl.u32 %v293, 16
        %v717 = vrot.slane %v715, 4
        %v718 = vshll.u32 %v293, 16
        %v720 = vrot.slane %v718, 5
        %v721 = vor.u32 %v717, %v720
        %v722 = vrot.slane %v721, 4
        %v724 = vshll.u32 %v294, 16
        %v726 = vrot.slane %v724, 5
        %v727 = vsel %vm299, %v722, %v726
        %s728 = scalar_lea.vmem %s2, 24
        %v729 = vld [vmem:[%s728] sm:$0xf]
        %v730 = vld [vmem:[%s728 + $0x4] sm:$0xf]
        %v731 = vunpack.c.l.b16 %v727
        %v732 = vpack.c.b16 %v417, %v416
        %v733 = vpack.c.b16 %v419, %v418
        %v734 = vpack.c.b16 %v421, %v420
        %v735 = vpack.c.b16 %v731, %v422
        %v738 = vunpack.c.l.b16 %v729
        %v739 = vunpack.c.l.b16 %v730
        %v740 = vpack.c.b16 %v739, %v738
        %v743 = vsel %vm433, %v732, 0
        %v746 = vsel %vm433, %v733, 0
        %v749 = vsel %vm433, %v734, 0
        %v752 = vsel %vm433, %v735, 0
        %754 = vmatprep.subr.bf16.mxu0 0
        %755 = vmatpush1.bf16.msra.mxu0 %v740
        %756 = vmatprep.subr.bf16.mxu0 0
        %757 = vmatpush1.bf16.msra.mxu0 0
        %758 = vmatprep.subr.bf16.mxu0 0
        %759 = vmatpush1.bf16.msra.mxu0 0
        %760 = vmatprep.subr.bf16.mxu0 0
        %761 = vmatpush1.bf16.msra.mxu0 0
        %762 = vmatprep.subr.bf16.mxu0 0
        %763 = vmatpush1.bf16.msra.mxu0 0
        %764 = vmatprep.subr.bf16.mxu0 0
        %765 = vmatpush1.bf16.msra.mxu0 0
        %766 = vmatprep.subr.bf16.mxu0 0
        %767 = vmatpush1.bf16.msra.mxu0 0
        %768 = vmatprep.subr.bf16.mxu0 0
        %769 = vmatpush1.bf16.msra.mxu0 0
        %770 = vmatprep.subr.bf16.mxu0 0
        %771 = vmatpush1.bf16.msra.mxu0 0
        %772 = vmatprep.subr.bf16.mxu0 0
        %773 = vmatpush1.bf16.msra.mxu0 0
        %774 = vmatprep.subr.bf16.mxu0 0
        %775 = vmatpush1.bf16.msra.mxu0 0
        %776 = vmatprep.subr.bf16.mxu0 0
        %777 = vmatpush1.bf16.msra.mxu0 0
        %778 = vmatprep.subr.bf16.mxu0 0
        %779 = vmatpush1.bf16.msra.mxu0 0
        %780 = vmatprep.subr.bf16.mxu0 0
        %781 = vmatpush1.bf16.msra.mxu0 0
        %782 = vmatprep.subr.bf16.mxu0 0
        %783 = vmatpush1.bf16.msra.mxu0 0
        %784 = vmatprep.subr.bf16.mxu0 0
        %785 = vmatpush1.bf16.msra.mxu0 0
        %786 = vmatprep.mubr.bf16.mxu0 0
        %787 = vmatmul.mubr.bf16.gmra.mrb[0].mxu0 %v743
        %v788 = vpop.f32.mrb[0].mxu0
        %v789 = vadd.f32 0.0, %v788
        %v790 = vpop.f32.mrb[0].mxu0
        %v791 = vpop.f32.mrb[0].mxu0
        %v792 = vadd.f32 0.0, %v791
        %v793 = vpop.f32.mrb[0].mxu0
        %794 = vmatprep.mubr.bf16.mxu0 0
        %795 = vmatmul.mubr.bf16.gmra.mrb[0].mxu0 %v746
        %v796 = vpop.f32.mrb[0].mxu0
        %v797 = vadd.f32 0.0, %v796
        %v798 = vpop.f32.mrb[0].mxu0
        %v799 = vpop.f32.mrb[0].mxu0
        %v800 = vadd.f32 0.0, %v799
        %v801 = vpop.f32.mrb[0].mxu0
        %802 = vmatprep.mubr.bf16.mxu0 0
        %803 = vmatmul.mubr.bf16.gmra.mrb[0].mxu0 %v749
        %v804 = vpop.f32.mrb[0].mxu0
        %v805 = vadd.f32 0.0, %v804
        %v806 = vpop.f32.mrb[0].mxu0
        %v807 = vpop.f32.mrb[0].mxu0
        %v808 = vadd.f32 0.0, %v807
        %v809 = vpop.f32.mrb[0].mxu0
        %810 = vmatprep.mubr.bf16.mxu0 0
        %811 = vmatmul.mubr.bf16.gmra.mrb[0].mxu0 %v752
        %v812 = vpop.f32.mrb[0].mxu0
        %v813 = vadd.f32 0.0, %v812
        %v814 = vpop.f32.mrb[0].mxu0
        %v815 = vpop.f32.mrb[0].mxu0
        %v816 = vadd.f32 0.0, %v815
        %v817 = vpop.f32.mrb[0].mxu0
        %818 = vdwg.mxu0
        %v819 = vadd.f32 %v706, %v789
        %v820 = vadd.f32 %v707, %v792
        %v821 = vadd.f32 %v708, %v797
        %v822 = vadd.f32 %v709, %v800
        %v823 = vadd.f32 %v710, %v805
        %v824 = vadd.f32 %v711, %v808
        %v825 = vadd.f32 %v712, %v813
        %v826 = vadd.f32 %v713, %v816
        %vm827 = vcmp.ge.f32.partialorder %v819, 0.0
        %vm828 = vcmp.ge.f32.partialorder %v820, 0.0
        %vm829 = vcmp.ge.f32.partialorder %v821, 0.0
        %vm830 = vcmp.ge.f32.partialorder %v822, 0.0
        %vm831 = vcmp.ge.f32.partialorder %v823, 0.0
        %vm832 = vcmp.ge.f32.partialorder %v824, 0.0
        %vm833 = vcmp.ge.f32.partialorder %v825, 0.0
        %vm834 = vcmp.ge.f32.partialorder %v826, 0.0
        %v835 = vmul.f32 %v819, 0.2
        %v836 = vmul.f32 %v820, 0.2
        %v837 = vmul.f32 %v821, 0.2
        %v838 = vmul.f32 %v822, 0.2
        %v839 = vmul.f32 %v823, 0.2
        %v840 = vmul.f32 %v824, 0.2
        %v841 = vmul.f32 %v825, 0.2
        %v842 = vmul.f32 %v826, 0.2
        %v843 = vsel %vm827, %v819, %v835
        %v844 = vsel %vm828, %v820, %v836
        %v845 = vsel %vm829, %v821, %v837
        %v846 = vsel %vm830, %v822, %v838
        %v847 = vsel %vm831, %v823, %v839
        %v848 = vsel %vm832, %v824, %v840
        %v849 = vsel %vm833, %v825, %v841
        %v850 = vsel %vm834, %v826, %v842
        %851 = vst [vmem:[%s240] sm:$0xff] %v843
        %852 = vst [vmem:[%s240 + $0x8] sm:$0xff] %v844
        %853 = vst [vmem:[%s240 + $0x10] sm:$0xff] %v845
        %854 = vst [vmem:[%s240 + $0x18] sm:$0xff] %v846
        %855 = vst [vmem:[%s240 + $0x20] sm:$0xff] %v847
        %856 = vst [vmem:[%s240 + $0x28] sm:$0xff] %v848
        %857 = vst [vmem:[%s240 + $0x30] sm:$0xff] %v849
        %858 = vst [vmem:[%s240 + $0x38] sm:$0xff] %v850
        %s859 = sand.u32 %s120, 1
        %s860 = scalar_lea.sflag [#allocation3], %s859
        %s861 = sand.u32 %s120, 1
        %s862 = smul.addr %s861, 64
        %s863 = scalar_lea.vmem [#allocation2], %s862
        // Predicated region
        $region33: #{tpu_custom_call.1} parent=31 // pred_check
          %p864 = pneg %p130
        $region34: #{tpu_custom_call.1} parent=31 // pred_check_branch
          %866 = sbr.rel (%p864) target = $region36
        $region35: #{tpu_custom_call.1} parent=31 // pred_region
          %s867 = smul.u32 8, %s22
          %s869 = ssub.s32 1024, 1024
          %870 = vsyncadd %s860, %s869
          %s871 = smul.addr %s21, 8
          %s872 = sadd.s32 %s867, %s871
          %s873 = smul.addr %s872, 128
          %s874 = scalar_lea.hbm %s3, %s873
          %s875 = sshll.u32 %s863, 4
          %s876 = int_to_ptr.vmem [resolvable:$true] %s875
          %881 = dma.vmem_to_hbm [thread:$0]  %s876, 1024, %s874, %s860, 128, 128, 8
        $region36: #{tpu_custom_call.1} parent=31 // pred_fallthru
          _
      $region32: #{tpu_custom_call.1} parent=5 // pred_fallthru
        _
      %p882 = scmp.le.s32.totalorder 2, %s12
      // Predicated region
      $region37: #{tpu_custom_call.1} parent=5 // pred_check
        %p883 = pneg %p882
      $region38: #{tpu_custom_call.1} parent=5 // pred_check_branch
        %885 = sbr.rel (%p883) target = $region40
      $region39: #{tpu_custom_call.1} parent=5 // pred_region
        %s886 = ssub.s32 %s12, 2
        // Predicated region
        $region41: #{tpu_custom_call.1} parent=39 // pred_check
          %p887 = pneg %p136
        $region42: #{tpu_custom_call.1} parent=39 // pred_check_branch
          %889 = sbr.rel (%p887) target = $region44
        $region43: #{tpu_custom_call.1} parent=39 // pred_region
          %s890 = sand.u32 %s121, 1
          %s891 = scalar_lea.sflag [#allocation3], %s890
          %s892 = sand.u32 %s121, 1
          %s893 = smul.addr %s892, 64
          %s894 = scalar_lea.vmem [#allocation2], %s893
          %895 = dma.done %s891, 1024
        $region44: #{tpu_custom_call.1} parent=39 // pred_fallthru
          _
      $region40: #{tpu_custom_call.1} parent=5 // pred_fallthru
        _
    $region6: #{tpu_custom_call.1} parent=1 // loop_footer
      %s16 = sadd.s32 1, %s12
    $region7: #{tpu_custom_call.1} parent=1 // loop_footer_branch
      %11 = sbr.rel target = $region3
    $region8: #{tpu_custom_call.1} parent=1 // loop_exit
      _
    %896 = vsyncpa [#allocation3], 1
    %s897 = scalar_lea.sflag [#allocation3], 1
    %898 = vsyncpa %s897, 1

</llo_original>
